<compile_context>
chip_gen: v7x
topology: tpu7x:2x2x1
jax: 0.10.0
libtpu: 0.0.40
codegen_flags: <defaults>
</compile_context>

<pallas_src>
import jax
import jax.numpy as jnp
from jax.experimental import pallas as pl
from jax.experimental.pallas import tpu as pltpu

LANES = 128  # lane-dense last dim (full vreg lane width)


def _round_up(x, m):
    return ((x + m - 1) // m) * m


def _vmem_capacity_bytes():
    """Physical VMEM of the current chip; conservative (v7x-sized) fallback."""
    try:
        return int(pltpu.get_tpu_info().vmem_capacity_bytes)
    except Exception:
        return 64 << 20


def _relu_kernel(x_ref, o_ref):
    # Single VPU max against a dtype-matched zero (safe for int dtypes too;
    # no zeros_like materialization, the scalar is broadcast in-register).
    x = x_ref[...]
    o_ref[...] = jnp.maximum(x, jnp.zeros((), x.dtype))


def _relu_bulk_pallas(x2d, donate=False):
    """Run the ReLU kernel on a lane-dense (m, 128) slab."""
    m, lanes = x2d.shape
    dtype = x2d.dtype
    itemsize = jnp.dtype(dtype).itemsize
    n_bulk = m * lanes

    # --- tile sizing -------------------------------------------------------
    # Target a few MiB per VMEM buffer so the ~0.35 us per-grid-step overhead
    # is fully amortized against HBM bandwidth (matters most on v7x at
    # 3.2 TB/s).  Keep the 4 pipeline buffers (2x in + 2x out, double
    # buffered) within ~1/4 of physical VMEM:
    #   v5e/v6e (128 MiB VMEM) -> 8 MiB/buffer, 32 MiB pipelined
    #   v7x     ( 64 MiB VMEM) -> 4 MiB/buffer, 16 MiB pipelined
    # Tile *bytes* are held constant across dtypes (bf16 gets 2x the rows).
    vmem_cap = _vmem_capacity_bytes()
    tile_bytes_target = max(2 << 20, min(8 << 20, vmem_cap // 16))
    max_rows = max(8, (tile_bytes_target // (lanes * itemsize)) // 8 * 8)

    if m <= max_rows:
        # Single block covering the whole slab: zero per-step pipeline
        # overhead (the small self-test tensors hit this path).
        row_tile = m
    else:
        # Balanced split: an even number of (near-)equal blocks so both v7x
        # TensorCores get the same amount of work under "parallel" semantics
        # instead of one big block + a tiny ragged tail.
        n_blocks = pl.cdiv(m, max_rows)
        if n_blocks % 2:
            n_blocks += 1
        row_tile = _round_up(pl.cdiv(m, n_blocks), 8)
    grid = (pl.cdiv(m, row_tile),)  # any uneven tail block is masked by Pallas

    tile_bytes = row_tile * lanes * itemsize
    # Explicit scoped-VMEM limit with headroom for the 4 pipeline buffers,
    # capped well below physical VMEM on every generation.
    vmem_limit = int(min(vmem_cap * 3 // 4,
                         max(32 << 20, 4 * tile_bytes + (8 << 20))))

    kwargs = {}
    if donate:
        # Reuse the input HBM buffer for the output.  Only requested by the
        # wrapper when no padding/slicing copy was made, so the alias really
        # refers to the caller's buffer.
        kwargs["input_output_aliases"] = {0: 0}

    return pl.pallas_call(
        _relu_kernel,
        out_shape=jax.ShapeDtypeStruct((m, lanes), dtype),
        grid_spec=pltpu.PrefetchScalarGridSpec(
            num_scalar_prefetch=0,
            grid=grid,
            in_specs=[pl.BlockSpec((row_tile, lanes), lambda i: (i, 0))],
            out_specs=pl.BlockSpec((row_tile, lanes), lambda i: (i, 0)),
        ),
        compiler_params=pltpu.CompilerParams(
            dimension_semantics=("parallel",),
            vmem_limit_bytes=vmem_limit,
        ),
        # Scheduling hint for XLA when this mem-bound op sits in a larger jit.
        cost_estimate=pl.CostEstimate(
            flops=n_bulk,
            transcendentals=0,
            bytes_accessed=2 * n_bulk * itemsize,
        ),
        **kwargs,
    )(x2d)


def relu_count_forward(x, tol=0.0, donate_input=False):
    """Pallas implementation of ReLUCount.forward (tol only matters in backward)."""
    del tol  # used only by the autograd backward in the reference module
    orig_shape = x.shape
    dtype = x.dtype
    n = x.size

    x_flat = jnp.reshape(x, (-1,))
    m = n // LANES
    bulk = m * LANES
    tail = n - bulk

    if m == 0:
        # Fewer than 128 elements: a kernel launch is pure overhead.
        out = jnp.maximum(x_flat, jnp.zeros((), dtype))
        return jnp.reshape(out, orig_shape)

    # Common case (conv-style activations): numel % 128 == 0, so the 2D view
    # is a pure reshape -- no padding copy, no trailing slice, no extra HBM
    # traffic around the kernel.  Ragged case: run the kernel on the aligned
    # bulk only and handle the <128-element tail with a tiny jnp op instead
    # of padding + slicing the whole array (which tripled HBM traffic).
    if tail:
        x_bulk = jax.lax.slice(x_flat, (0,), (bulk,))
        x_tail = jax.lax.slice(x_flat, (bulk,), (n,))
    else:
        x_bulk = x_flat
        x_tail = None

    x2d = jnp.reshape(x_bulk, (m, LANES))
    out2d = _relu_bulk_pallas(x2d, donate=(donate_input and tail == 0))
    out_flat = jnp.reshape(out2d, (-1,))

    if tail:
        out_flat = jnp.concatenate(
            [out_flat, jnp.maximum(x_tail, jnp.zeros((), dtype))])
    return jnp.reshape(out_flat, orig_shape)


if __name__ == "__main__":
    key = jax.random.PRNGKey(0)

    # NCHW conv-style activation tensor (numel divisible by 128 -> pure kernel path).
    x = jax.random.normal(key, (2, 4, 16, 16), dtype=jnp.float32)
    y = relu_count_forward(x, tol=1e-6)
    y = jax.block_until_ready(y)
    ref = jnp.maximum(x, 0.0)
    assert y.shape == x.shape and y.dtype == x.dtype
    assert jnp.allclose(y, ref), "mismatch vs reference ReLU (aligned path)"

    # Ragged shape (numel % 128 != 0) exercises the bulk-kernel + jnp-tail path.
    xr = jax.random.normal(jax.random.PRNGKey(1), (9, 29), dtype=jnp.float32)
    yr = jax.block_until_ready(relu_count_forward(xr))
    assert yr.shape == xr.shape and yr.dtype == xr.dtype
    assert jnp.allclose(yr, jnp.maximum(xr, 0.0)), "mismatch (ragged path)"

    # bf16 input checks the dtype-aware tiling and dtype-matched zero.
    xb = jax.random.normal(jax.random.PRNGKey(2), (2, 4, 16, 16),
                           dtype=jnp.bfloat16)
    yb = jax.block_until_ready(relu_count_forward(xb))
    assert yb.dtype == xb.dtype
    assert jnp.array_equal(yb, jnp.maximum(xb, jnp.zeros((), xb.dtype))), \
        "mismatch (bf16 path)"

    print("KERNEL_OK")
</pallas_src>

<mosaic_0001>
module attributes {stable_mosaic.version = 11 : i64} {
  func.func @_relu_kernel(%arg0: i32, %arg1: memref<16x128xf32, #tpu.memory_space<vmem>>, %arg2: memref<16x128xf32, #tpu.memory_space<vmem>>) attributes {dimension_semantics = [#tpu.dimension_semantics<parallel>], iteration_bounds = array<i64: 1>, scalar_prefetch = 0 : i64, scratch_operands = 0 : i64, tpu.core_type = #tpu.core_type<tc>, window_params = [{transform_indices = @transform_0, window_bounds = array<i64: 16, 128>}, {transform_indices = @transform_1, window_bounds = array<i64: 16, 128>}]} {
    %c0 = arith.constant 0 : index
    %c0_0 = arith.constant 0 : index
    %0 = vector.load %arg1[%c0, %c0_0] : memref<16x128xf32, #tpu.memory_space<vmem>>, vector<16x128xf32>
    %cst = arith.constant 0.000000e+00 : f32
    %1 = vector.broadcast %cst : f32 to vector<16x128xf32>
    %2 = arith.maximumf %0, %1 : vector<16x128xf32>
    %c0_1 = arith.constant 0 : index
    %c0_2 = arith.constant 0 : index
    %3 = vector.load %arg2[%c0_1, %c0_2] : memref<16x128xf32, #tpu.memory_space<vmem>>, vector<16x128xf32>
    tpu.vector_store %arg2[%c0_1, %c0_2], %2 {strides = array<i32>} : memref<16x128xf32, #tpu.memory_space<vmem>>, vector<16x128xf32>,
    return
  }
  func.func @transform_0(%arg0: i32) -> (i32, i32) {
    %c0_i32 = arith.constant 0 : i32
    %c0_i32_0 = arith.constant 0 : i32
    return %arg0, %c0_i32 : i32, i32
  }
  func.func @transform_1(%arg0: i32) -> (i32, i32) {
    %c0_i32 = arith.constant 0 : i32
    %c0_i32_0 = arith.constant 0 : i32
    return %arg0, %c0_i32 : i32, i32
  }
}

</mosaic_0001>

<llo_original>
// kernel: tpu_custom_call.1
$region0: #{tpu_custom_call.1}
  #allocation0 [shape = 'u32[]', space=smem, size = 0x4, offset = 0x4, fixed_abs, tag = 'smem constant byte address 0x4 - core index']
  #allocation1 [shape = 'u32[144,128]{1,0:T(1,128)}', space=vmem, size = 0x12000, scoped, tag = 'internal scratch']
  %s0 = inlined_call_operand.hbm [shape: f32[16,128], index: 0, kind: input, shape index: {}]
  %s1 = inlined_call_operand.hbm [shape: f32[16,128], index: 1, kind: output, shape index: {}]
  %s2 = sld [smem:[#allocation0]]
  $region18: #{tpu_custom_call.1} parent=0
    _
  %s4 = ssub.s32 1, %s2
  %s5 = scalar_select 0, %s4, %s2
  $region1: #{tpu_custom_call.1} parent=0
    #allocation2 [shape = 'u8[8192]{0}', space=vmem, size = 0x2000, scoped, tag = 'input window, operand 0, single buffered']
    #allocation3 [shape = 's32[1]{0}', space=sflag, size = 0x4, scoped, tag = 'scoped memory for tpu_custom_call.1']
    #allocation4 [shape = 's32[1]{0}', space=sflag, size = 0x4, scoped, tag = 'scoped memory for tpu_custom_call.1']
    #allocation5 [shape = 'u8[8192]{0}', space=vmem, size = 0x2000, scoped, tag = 'output window, operand 0, single buffered']
    %6 = vsyncpa [#allocation3], 0
    %7 = vsyncpa [#allocation4], 0
    // Predicated region
    $region2: #{tpu_custom_call.1} parent=1 // pred_check
      _
    $region3: #{tpu_custom_call.1} parent=1 // pred_check_branch
      %9 = sbr.rel (0) target = $region5
    $region4: #{tpu_custom_call.1} parent=1 // pred_region
      %s11 = ssub.s32 256, 256
      %12 = vsyncadd [#allocation3], %s11
      %s13 = sshll.u32 [#allocation2], 4
      %s14 = int_to_ptr.vmem [resolvable:$true] %s13
      %19 = dma.hbm_to_vmem [thread:$0]  %s0, 256, %s14, [#allocation3], 128, 128, 8
    $region5: #{tpu_custom_call.1} parent=1 // pred_fallthru
      _
    // Predicated region
    $region6: #{tpu_custom_call.1} parent=1 // pred_check
      _
    $region7: #{tpu_custom_call.1} parent=1 // pred_check_branch
      %21 = sbr.rel (0) target = $region9
    $region8: #{tpu_custom_call.1} parent=1 // pred_region
      %22 = dma.done [#allocation3], 256
    $region9: #{tpu_custom_call.1} parent=1 // pred_fallthru
      _
    %v23 = vld [vmem:[#allocation2] sm:$0xff]
    %v24 = vld [vmem:[#allocation2 + $0x8] sm:$0xff]
    %v25 = vmax.f32 %v23, 0.0
    %v26 = vmax.f32 %v24, 0.0
    %27 = vst [vmem:[#allocation5] sm:$0xff] %v25
    %28 = vst [vmem:[#allocation5 + $0x8] sm:$0xff] %v26
    // Predicated region
    $region10: #{tpu_custom_call.1} parent=1 // pred_check
      _
    $region11: #{tpu_custom_call.1} parent=1 // pred_check_branch
      %30 = sbr.rel (0) target = $region13
    $region12: #{tpu_custom_call.1} parent=1 // pred_region
      %s32 = ssub.s32 256, 256
      %33 = vsyncadd [#allocation4], %s32
      %s34 = sshll.u32 [#allocation5], 4
      %s35 = int_to_ptr.vmem [resolvable:$true] %s34
      %40 = dma.vmem_to_hbm [thread:$0]  %s35, 256, %s1, [#allocation4], 128, 128, 8
    $region13: #{tpu_custom_call.1} parent=1 // pred_fallthru
      _
    // Predicated region
    $region14: #{tpu_custom_call.1} parent=1 // pred_check
      _
    $region15: #{tpu_custom_call.1} parent=1 // pred_check_branch
      %42 = sbr.rel (0) target = $region17
    $region16: #{tpu_custom_call.1} parent=1 // pred_region
      %43 = dma.done [#allocation4], 256
    $region17: #{tpu_custom_call.1} parent=1 // pred_fallthru
      _
    %44 = vsyncpa [#allocation3], 1
    %45 = vsyncpa [#allocation4], 1

</llo_original>
